<compile_context>
chip_gen: v7x
topology: tpu7x:2x2x1
jax: 0.10.0
libtpu: 0.0.40
codegen_flags: <defaults>
</compile_context>

<pallas_src>
import functools

import jax
import jax.numpy as jnp
from jax.experimental import pallas as pl
from jax.experimental.pallas import tpu as pltpu


def _round_up(v, m):
    return ((v + m - 1) // m) * m


def _internal_classifier_kernel(x_ref, w_ref, b_ref, o_ref, acc_ref, *, inv_hw):
    """One grid step.

    x_ref:   (TB, C, THW)  streaming spatial tile of the input
    w_ref:   (C, NCp)      fc weight (transposed, lane-padded), resident across the grid
    b_ref:   (1, NCp)      fc bias (lane-padded), resident
    o_ref:   (TB, NCp)     output block (written at the last spatial step)
    acc_ref: (TB, C) f32   running spatial sum (VMEM scratch)
    """
    k = pl.program_id(1)

    @pl.when(k == 0)
    def _init():
        acc_ref[...] = jnp.zeros_like(acc_ref)

    # Partial spatial sum for this tile (f32 accumulation; no whole-tile cast).
    acc_ref[...] += jnp.sum(x_ref[...], axis=-1, dtype=jnp.float32)

    @pl.when(k == pl.num_programs(1) - 1)
    def _finalize():
        pooled = acc_ref[...] * inv_hw                      # divide by the TRUE H*W once
        out = jnp.dot(pooled, w_ref[...],
                      preferred_element_type=jnp.float32)   # (TB, NCp) on the MXU
        o_ref[...] = (out + b_ref[...]).astype(o_ref.dtype)


def internal_classifier_forward(x, weight, bias, *, x_tile_budget_bytes=6 * 1024 * 1024):
    """x: (B, C, H, W); weight: (num_classes, C) torch nn.Linear layout; bias: (num_classes,)."""
    B, C, H, W = x.shape
    NC = weight.shape[0]
    HW = H * W
    item = x.dtype.itemsize

    # ---- tile selection ---------------------------------------------------------------
    NC_pad = _round_up(NC, 128)          # lane-dense output stores + sane MXU N
    TB = 8                               # batch tile (multiple of 8 sublanes)
    if TB * C * HW * item <= x_tile_budget_bytes:
        # Full spatial extent per step: grow the batch tile to amortize the ~0.35us/step
        # overhead, without padding the batch far past its real size.
        THW, HW_pad = HW, HW
        while (TB < 128 and TB * 2 <= _round_up(B, 8)
               and (TB * 2) * C * HW * item <= x_tile_budget_bytes):
            TB *= 2
    else:
        # Stream the spatial axis in 128-lane-aligned tiles.
        THW = max(128, (x_tile_budget_bytes // (TB * C * item)) // 128 * 128)
        HW_pad = _round_up(HW, THW)
    B_pad = _round_up(B, TB)

    # ---- glue / padding (zeros never perturb the sum; we divide by the true HW) --------
    x_flat = x.reshape(B, C, HW)
    if (B_pad, HW_pad) != (B, HW):
        x_flat = jnp.pad(x_flat, ((0, B_pad - B), (0, 0), (0, HW_pad - HW)))
    w_t = weight.T.astype(jnp.float32)                       # (C, NC)
    if NC_pad != NC:
        w_t = jnp.pad(w_t, ((0, 0), (0, NC_pad - NC)))
        b_p = jnp.pad(bias.astype(jnp.float32), (0, NC_pad - NC))
    else:
        b_p = bias.astype(jnp.float32)
    b2 = b_p.reshape(1, NC_pad)

    grid = (B_pad // TB, HW_pad // THW)

    # VMEM budget: double-buffered x/out blocks + resident weight/bias + accumulator.
    x_blk = TB * C * THW * item
    vmem_need = (2 * x_blk + 2 * C * NC_pad * 4 + 2 * NC_pad * 4
                 + 2 * TB * NC_pad * 4 + TB * C * 4)
    vmem_limit = int(min(64 * 1024 * 1024, max(16 * 1024 * 1024, 2 * vmem_need)))

    kernel = functools.partial(_internal_classifier_kernel, inv_hw=float(1.0 / HW))

    out_padded = pl.pallas_call(
        kernel,
        out_shape=jax.ShapeDtypeStruct((B_pad, NC_pad), jnp.float32),
        grid_spec=pltpu.PrefetchScalarGridSpec(
            num_scalar_prefetch=0,
            grid=grid,
            in_specs=[
                pl.BlockSpec((TB, C, THW), lambda i, k: (i, 0, k)),
                pl.BlockSpec((C, NC_pad), lambda i, k: (0, 0)),   # resident weight
                pl.BlockSpec((1, NC_pad), lambda i, k: (0, 0)),   # resident bias
            ],
            out_specs=pl.BlockSpec((TB, NC_pad), lambda i, k: (i, 0)),
            scratch_shapes=[pltpu.VMEM((TB, C), jnp.float32)],
        ),
        compiler_params=pltpu.CompilerParams(
            dimension_semantics=("parallel", "arbitrary"),
            vmem_limit_bytes=vmem_limit,
        ),
        cost_estimate=pl.CostEstimate(
            flops=B * C * HW + 2 * B * C * NC_pad,
            transcendentals=0,
            bytes_accessed=(B_pad * C * HW_pad * item + C * NC_pad * 4
                            + NC_pad * 4 + B_pad * NC_pad * 4),
        ),
    )(x_flat, w_t, b2)

    return out_padded[:B, :NC]


def reference_forward(x, weight, bias):
    pooled = jnp.mean(x, axis=(2, 3))          # AdaptiveAvgPool2d((1,1)) + flatten
    return pooled @ weight.T + bias


if __name__ == "__main__":
    # Small shapes consistent with the module: batch=2, channels=4, spatial=16x16,
    # num_classes=10, block_expansion=1.
    B, C, H, W = 2, 4, 16, 16
    NUM_CLASSES = 10

    key = jax.random.PRNGKey(0)
    kx, kw, kb = jax.random.split(key, 3)

    x = jax.random.normal(kx, (B, C, H, W), dtype=jnp.float32)
    # Deterministic nn.Linear-style init: uniform(-1/sqrt(fan_in), 1/sqrt(fan_in))
    bound = 1.0 / jnp.sqrt(jnp.float32(C))
    weight = jax.random.uniform(kw, (NUM_CLASSES, C), jnp.float32, -bound, bound)
    bias = jax.random.uniform(kb, (NUM_CLASSES,), jnp.float32, -bound, bound)

    out = internal_classifier_forward(x, weight, bias)
    out = jax.block_until_ready(out)

    ref = reference_forward(x, weight, bias)
    assert out.shape == (B, NUM_CLASSES)
    assert jnp.allclose(out, ref, atol=1e-5, rtol=1e-5), "mismatch vs reference"

    print("KERNEL_OK")
</pallas_src>

<mosaic_0001>
module attributes {stable_mosaic.version = 11 : i64} {
  func.func @_internal_classifier_kernel(%arg0: i32, %arg1: i32, %arg2: memref<8x4x256xf32, #tpu.memory_space<vmem>>, %arg3: memref<4x128xf32, #tpu.memory_space<vmem>>, %arg4: memref<1x128xf32, #tpu.memory_space<vmem>>, %arg5: memref<8x128xf32, #tpu.memory_space<vmem>>, %arg6: memref<8x4xf32, #tpu.memory_space<vmem>>) attributes {dimension_semantics = [#tpu.dimension_semantics<parallel>, #tpu.dimension_semantics<arbitrary>], iteration_bounds = array<i64: 1, 1>, scalar_prefetch = 0 : i64, scratch_operands = 1 : i64, tpu.core_type = #tpu.core_type<tc>, window_params = [{transform_indices = @transform_0, window_bounds = array<i64: 8, 4, 256>}, {pipeline_mode = #tpu.pipeline_mode<synchronous>, transform_indices = @transform_1, window_bounds = array<i64: 4, 128>}, {pipeline_mode = #tpu.pipeline_mode<synchronous>, transform_indices = @transform_2, window_bounds = array<i64: 1, 128>}, {transform_indices = @transform_3, window_bounds = array<i64: 8, 128>}]} {
    %c0_i32 = arith.constant 0 : i32
    %0 = arith.cmpi eq, %arg1, %c0_i32 : i32
    %1 = arith.extui %0 : i1 to i32
    %c0_i32_0 = arith.constant 0 : i32
    %2 = arith.cmpi ne, %1, %c0_i32_0 : i32
    scf.if %2 {
      %cst_9 = arith.constant 0.000000e+00 : f32
      %11 = vector.broadcast %cst_9 : f32 to vector<8x4xf32>
      %c0_10 = arith.constant 0 : index
      %c0_11 = arith.constant 0 : index
      %12 = vector.load %arg6[%c0_10, %c0_11] : memref<8x4xf32, #tpu.memory_space<vmem>>, vector<8x4xf32>
      tpu.vector_store %arg6[%c0_10, %c0_11], %11 {strides = array<i32>} : memref<8x4xf32, #tpu.memory_space<vmem>>, vector<8x4xf32>,
    } else {
    }
    %c0 = arith.constant 0 : index
    %c0_1 = arith.constant 0 : index
    %3 = vector.load %arg6[%c0, %c0_1] : memref<8x4xf32, #tpu.memory_space<vmem>>, vector<8x4xf32>
    %c0_2 = arith.constant 0 : index
    %c0_3 = arith.constant 0 : index
    %c0_4 = arith.constant 0 : index
    %4 = vector.load %arg2[%c0_2, %c0_3, %c0_4] : memref<8x4x256xf32, #tpu.memory_space<vmem>>, vector<8x4x256xf32>
    %cst = arith.constant dense<0.000000e+00> : vector<8x4xf32>
    %5 = vector.multi_reduction <add>, %4, %cst [2] : vector<8x4x256xf32> to vector<8x4xf32>
    %6 = arith.addf %3, %5 : vector<8x4xf32>
    %c0_5 = arith.constant 0 : index
    %c0_6 = arith.constant 0 : index
    %7 = vector.load %arg6[%c0_5, %c0_6] : memref<8x4xf32, #tpu.memory_space<vmem>>, vector<8x4xf32>
    tpu.vector_store %arg6[%c0_5, %c0_6], %6 {strides = array<i32>} : memref<8x4xf32, #tpu.memory_space<vmem>>, vector<8x4xf32>,
    %c0_i32_7 = arith.constant 0 : i32
    %8 = arith.cmpi eq, %arg1, %c0_i32_7 : i32
    %9 = arith.extui %8 : i1 to i32
    %c0_i32_8 = arith.constant 0 : i32
    %10 = arith.cmpi ne, %9, %c0_i32_8 : i32
    scf.if %10 {
      %c0_9 = arith.constant 0 : index
      %c0_10 = arith.constant 0 : index
      %11 = vector.load %arg6[%c0_9, %c0_10] : memref<8x4xf32, #tpu.memory_space<vmem>>, vector<8x4xf32>
      %cst_11 = arith.constant 3.906250e-03 : f32
      %12 = vector.broadcast %cst_11 : f32 to vector<8x4xf32>
      %13 = arith.mulf %11, %12 : vector<8x4xf32>
      %c0_12 = arith.constant 0 : index
      %c0_13 = arith.constant 0 : index
      %14 = vector.load %arg3[%c0_12, %c0_13] : memref<4x128xf32, #tpu.memory_space<vmem>>, vector<4x128xf32>
      %cst_14 = arith.constant dense<0.000000e+00> : vector<8x128xf32>
      %15 = tpu.matmul %13, %14, %cst_14 {dimension_numbers = #tpu.dot_dimension_numbers<[1], [0], [0], [1], [0, 0, 1, 1], [], []>} : vector<8x4xf32>, vector<4x128xf32>, vector<8x128xf32> -> vector<8x128xf32>
      %c0_15 = arith.constant 0 : index
      %c0_16 = arith.constant 0 : index
      %16 = vector.load %arg4[%c0_15, %c0_16] : memref<1x128xf32, #tpu.memory_space<vmem>>, vector<1x128xf32>
      %17 = vector.broadcast %16 : vector<1x128xf32> to vector<8x128xf32>
      %18 = arith.addf %15, %17 : vector<8x128xf32>
      %c0_17 = arith.constant 0 : index
      %c0_18 = arith.constant 0 : index
      %19 = vector.load %arg5[%c0_17, %c0_18] : memref<8x128xf32, #tpu.memory_space<vmem>>, vector<8x128xf32>
      tpu.vector_store %arg5[%c0_17, %c0_18], %18 {strides = array<i32>} : memref<8x128xf32, #tpu.memory_space<vmem>>, vector<8x128xf32>,
    } else {
    }
    return
  }
  func.func @transform_0(%arg0: i32, %arg1: i32) -> (i32, i32, i32) {
    %c0_i32 = arith.constant 0 : i32
    %c0_i32_0 = arith.constant 0 : i32
    return %arg0, %c0_i32, %arg1 : i32, i32, i32
  }
  func.func @transform_1(%arg0: i32, %arg1: i32) -> (i32, i32) {
    %c0_i32 = arith.constant 0 : i32
    %c0_i32_0 = arith.constant 0 : i32
    %c0_i32_1 = arith.constant 0 : i32
    return %c0_i32, %c0_i32_0 : i32, i32
  }
  func.func @transform_2(%arg0: i32, %arg1: i32) -> (i32, i32) {
    %c0_i32 = arith.constant 0 : i32
    %c0_i32_0 = arith.constant 0 : i32
    %c0_i32_1 = arith.constant 0 : i32
    return %c0_i32, %c0_i32_0 : i32, i32
  }
  func.func @transform_3(%arg0: i32, %arg1: i32) -> (i32, i32) {
    %c0_i32 = arith.constant 0 : i32
    %c0_i32_0 = arith.constant 0 : i32
    return %arg0, %c0_i32 : i32, i32
  }
}

</mosaic_0001>

<llo_original>
// kernel: tpu_custom_call.1
$region0: #{tpu_custom_call.1}
  #allocation0 [shape = 'u32[]', space=smem, size = 0x4, offset = 0x4, fixed_abs, tag = 'smem constant byte address 0x4 - core index']
  #allocation1 [shape = 'u32[144,128]{1,0:T(1,128)}', space=vmem, size = 0x12000, scoped, tag = 'internal scratch']
  #allocation2 [shape = 'f32[8,4]{1,0:T(8,128)}', space=vmem, size = 0x1000, scoped, tag = 'scratch operand']
  %s0 = inlined_call_operand.hbm [shape: f32[8,4,256], index: 0, kind: input, shape index: {}]
  %s1 = inlined_call_operand.hbm [shape: f32[4,128], index: 1, kind: input, shape index: {}]
  %s2 = inlined_call_operand.vmem [shape: f32[1,128], index: 2, kind: input, shape index: {}]
  %s3 = inlined_call_operand.hbm [shape: f32[8,128], index: 3, kind: output, shape index: {}]
  %s4 = sld [smem:[#allocation0]]
  $region38: #{tpu_custom_call.1} parent=0
    _
  %s6 = ssub.s32 1, %s4
  %s7 = scalar_select 0, %s6, %s4
  $region1: #{tpu_custom_call.1} parent=0
    #allocation3 [shape = 'u8[32768]{0}', space=vmem, size = 0x8000, scoped, tag = 'input window, operand 0, single buffered']
    #allocation4 [shape = 's32[1]{0}', space=sflag, size = 0x4, scoped, tag = 'scoped memory for tpu_custom_call.1']
    #allocation5 [shape = 's32[1]{0}', space=sflag, size = 0x4, scoped, tag = 'scoped memory for tpu_custom_call.1']
    #allocation6 [shape = 'u8[2048]{0}', space=vmem, size = 0x800, scoped, tag = 'input window, operand 1, single buffered']
    #allocation7 [shape = 's32[1]{0}', space=sflag, size = 0x4, scoped, tag = 'scoped memory for tpu_custom_call.1']
    #allocation8 [shape = 'u8[4096]{0}', space=vmem, size = 0x1000, scoped, tag = 'output window, operand 0, single buffered']
    %8 = vsyncpa [#allocation4], 0
    %9 = vsyncpa [#allocation7], 0
    %10 = vsyncpa [#allocation5], 0
    // Predicated region
    $region2: #{tpu_custom_call.1} parent=1 // pred_check
      _
    $region3: #{tpu_custom_call.1} parent=1 // pred_check_branch
      %12 = sbr.rel (0) target = $region5
    $region4: #{tpu_custom_call.1} parent=1 // pred_region
      %s14 = ssub.s32 1024, 1024
      %15 = vsyncadd [#allocation4], %s14
      %s16 = sshll.u32 [#allocation3], 4
      %s17 = int_to_ptr.vmem [resolvable:$true] %s16
      %22 = dma.hbm_to_vmem [thread:$0]  %s0, 1024, %s17, [#allocation4], 128, 128, 8
    $region5: #{tpu_custom_call.1} parent=1 // pred_fallthru
      _
    // Predicated region
    $region6: #{tpu_custom_call.1} parent=1 // pred_check
      _
    $region7: #{tpu_custom_call.1} parent=1 // pred_check_branch
      %24 = sbr.rel (0) target = $region9
    $region8: #{tpu_custom_call.1} parent=1 // pred_region
      %s26 = ssub.s32 64, 64
      %27 = vsyncadd [#allocation7], %s26
      %s29 = sshll.u32 [#allocation6], 4
      %s30 = int_to_ptr.vmem [resolvable:$true] %s29
      %32 = dma.hbm_to_vmem [thread:$0]  %s1, 64, %s30, [#allocation7]
    $region9: #{tpu_custom_call.1} parent=1 // pred_fallthru
      _
    // Predicated region
    $region10: #{tpu_custom_call.1} parent=1 // pred_check
      _
    $region11: #{tpu_custom_call.1} parent=1 // pred_check_branch
      %34 = sbr.rel (0) target = $region13
    $region12: #{tpu_custom_call.1} parent=1 // pred_region
      _
    $region13: #{tpu_custom_call.1} parent=1 // pred_fallthru
      _
    // Predicated region
    $region14: #{tpu_custom_call.1} parent=1 // pred_check
      _
    $region15: #{tpu_custom_call.1} parent=1 // pred_check_branch
      %36 = sbr.rel (0) target = $region17
    $region16: #{tpu_custom_call.1} parent=1 // pred_region
      %37 = dma.done [#allocation4], 1024
    $region17: #{tpu_custom_call.1} parent=1 // pred_fallthru
      _
    // Predicated region
    $region18: #{tpu_custom_call.1} parent=1 // pred_check
      _
    $region19: #{tpu_custom_call.1} parent=1 // pred_check_branch
      %39 = sbr.rel (0) target = $region21
    $region20: #{tpu_custom_call.1} parent=1 // pred_region
      %40 = dma.done [#allocation7], 64
    $region21: #{tpu_custom_call.1} parent=1 // pred_fallthru
      _
    %p41 = scmp.eq.s32.totalorder 0, 0
    // Predicated region
    $region22: #{tpu_custom_call.1} parent=1 // pred_check
      %p42 = pneg %p41
    $region23: #{tpu_custom_call.1} parent=1 // pred_check_branch
      %44 = sbr.rel (%p42) target = $region25
    $region24: #{tpu_custom_call.1} parent=1 // pred_region
      %vm45 = vcmask 31744
      %46 = vst.msk [vmem:[#allocation2] sm:$0xff] %vm45, 0.0
    $region25: #{tpu_custom_call.1} parent=1 // pred_fallthru
      _
    %v47 = vld [vmem:[#allocation2] sm:$0xff]
    %v48 = vld [vmem:[#allocation3] sm:$0xff]
    %v49 = vld [vmem:[#allocation3 + $0x8] sm:$0xff]
    %v50 = vld [vmem:[#allocation3 + $0x10] sm:$0xff]
    %v51 = vld [vmem:[#allocation3 + $0x18] sm:$0xff]
    %v52 = vld [vmem:[#allocation3 + $0x20] sm:$0xff]
    %v53 = vld [vmem:[#allocation3 + $0x28] sm:$0xff]
    %v54 = vld [vmem:[#allocation3 + $0x30] sm:$0xff]
    %v55 = vld [vmem:[#allocation3 + $0x38] sm:$0xff]
    %v64 = vcombine.high %v48, %v48
    %v65 = vcombine.high %v49, %v49
    %v66 = vcombine.high %v50, %v50
    %v67 = vcombine.high %v51, %v51
    %v68 = vcombine.high %v52, %v52
    %v69 = vcombine.high %v53, %v53
    %v70 = vcombine.high %v54, %v54
    %v71 = vcombine.high %v55, %v55
    %vm80 = vcmask 1043456
    %v81 = vsel %vm80, %v48, 0.0
    %v82 = vsel %vm80, %v64, 0.0
    %v83 = vadd.f32 %v81, %v82
    %84 = vadd.xlane.f32.xlu0 %v83
    %v85 = vpop.xlane.xlu0 %84
    %v86 = vsel %vm80, %v49, 0.0
    %v87 = vsel %vm80, %v65, 0.0
    %v88 = vadd.f32 %v86, %v87
    %89 = vadd.xlane.f32.xlu0 %v88
    %v90 = vpop.xlane.xlu0 %89
    %v91 = vsel %vm80, %v50, 0.0
    %v92 = vsel %vm80, %v66, 0.0
    %v93 = vadd.f32 %v91, %v92
    %94 = vadd.xlane.f32.xlu0 %v93
    %v95 = vpop.xlane.xlu0 %94
    %v96 = vsel %vm80, %v51, 0.0
    %v97 = vsel %vm80, %v67, 0.0
    %v98 = vadd.f32 %v96, %v97
    %99 = vadd.xlane.f32.xlu0 %v98
    %v100 = vpop.xlane.xlu0 %99
    %v101 = vsel %vm80, %v52, 0.0
    %v102 = vsel %vm80, %v68, 0.0
    %v103 = vadd.f32 %v101, %v102
    %104 = vadd.xlane.f32.xlu0 %v103
    %v105 = vpop.xlane.xlu0 %104
    %v106 = vsel %vm80, %v53, 0.0
    %v107 = vsel %vm80, %v69, 0.0
    %v108 = vadd.f32 %v106, %v107
    %109 = vadd.xlane.f32.xlu0 %v108
    %v110 = vpop.xlane.xlu0 %109
    %v111 = vsel %vm80, %v54, 0.0
    %v112 = vsel %vm80, %v70, 0.0
    %v113 = vadd.f32 %v111, %v112
    %114 = vadd.xlane.f32.xlu0 %v113
    %v115 = vpop.xlane.xlu0 %114
    %v116 = vsel %vm80, %v55, 0.0
    %v117 = vsel %vm80, %v71, 0.0
    %v118 = vadd.f32 %v116, %v117
    %119 = vadd.xlane.f32.xlu0 %v118
    %v120 = vpop.xlane.xlu0 %119
    %v129 = vlaneseq
    %v130 = vand.u32 %v129, 127
    %v131 = vlaneseq
    %v132 = vshrl.u32 %v131, 7
    %v133 = vsub.s32 %v130, %v132
    %v134 = vrot.slane %v85, %v133
    %v135 = vlaneseq
    %v136 = vshrl.u32 %v135, 7
    %v137 = vsub.s32 %v130, %v136
    %v138 = vrot.slane %v90, %v137
    %v139 = vlaneseq
    %v140 = vshrl.u32 %v139, 7
    %v141 = vsub.s32 %v130, %v140
    %v142 = vrot.slane %v95, %v141
    %v143 = vlaneseq
    %v144 = vshrl.u32 %v143, 7
    %v145 = vsub.s32 %v130, %v144
    %v146 = vrot.slane %v100, %v145
    %v147 = vlaneseq
    %v148 = vshrl.u32 %v147, 7
    %v149 = vsub.s32 %v130, %v148
    %v150 = vrot.slane %v105, %v149
    %v151 = vlaneseq
    %v152 = vshrl.u32 %v151, 7
    %v153 = vsub.s32 %v130, %v152
    %v154 = vrot.slane %v110, %v153
    %v155 = vlaneseq
    %v156 = vshrl.u32 %v155, 7
    %v157 = vsub.s32 %v130, %v156
    %v158 = vrot.slane %v115, %v157
    %v159 = vlaneseq
    %v160 = vshrl.u32 %v159, 7
    %v161 = vsub.s32 %v130, %v160
    %v162 = vrot.slane %v120, %v161
    %vm163 = vcmask 1041409
    %v164 = vsel %vm163, %v138, %v134
    %vm165 = vcmask 1042434
    %v166 = vsel %vm165, %v142, %v164
    %vm167 = vcmask 1043459
    %v168 = vsel %vm167, %v146, %v166
    %vm169 = vcmask 1044484
    %v170 = vsel %vm169, %v150, %v168
    %vm171 = vcmask 1045509
    %v172 = vsel %vm171, %v154, %v170
    %vm173 = vcmask 1046534
    %v174 = vsel %vm173, %v158, %v172
    %vm175 = vcmask 1047559
    %v176 = vsel %vm175, %v162, %v174
    %v178 = vadd.f32 %v47, %v176
    %vm179 = vcmask 31744
    %180 = vst.msk [vmem:[#allocation2] sm:$0xff] %vm179, %v178
    // Predicated region
    $region26: #{tpu_custom_call.1} parent=1 // pred_check
      %p181 = pneg %p41
    $region27: #{tpu_custom_call.1} parent=1 // pred_check_branch
      %183 = sbr.rel (%p181) target = $region29
    $region28: #{tpu_custom_call.1} parent=1 // pred_region
      %v184 = vld [vmem:[#allocation2] sm:$0xff]
      %v185 = vmul.f32 %v184, 0.00390625
      %v186 = vld [vmem:[#allocation6] sm:$0xf]
      %v187 = vld [vmem:[%s2] sm:$0x1]
      %v189 = vlaneseq
      %v190 = vshrl.u32 %v189, 7
      %v191 = vsub.s32 0, %v190
      %v192 = vrot.slane %v187, %v191
      %v195 = vsel %vm179, %v185, 0
      %v198 = vsel %vm80, %v186, 0
      %200 = vmatprep.subr.mxu0 0.0
      %201 = vmatpush1.msra.mxu0 %v198
      %202 = vmatprep.subr.mxu0 0.0
      %203 = vmatpush1.msra.mxu0 0.0
      %204 = vmatprep.subr.mxu0 0.0
      %205 = vmatpush1.msra.mxu0 0.0
      %206 = vmatprep.subr.mxu0 0.0
      %207 = vmatpush1.msra.mxu0 0.0
      %208 = vmatprep.subr.mxu0 0.0
      %209 = vmatpush1.msra.mxu0 0.0
      %210 = vmatprep.subr.mxu0 0.0
      %211 = vmatpush1.msra.mxu0 0.0
      %212 = vmatprep.subr.mxu0 0.0
      %213 = vmatpush1.msra.mxu0 0.0
      %214 = vmatprep.subr.mxu0 0.0
      %215 = vmatpush1.msra.mxu0 0.0
      %216 = vmatprep.subr.mxu0 0.0
      %217 = vmatpush1.msra.mxu0 0.0
      %218 = vmatprep.subr.mxu0 0.0
      %219 = vmatpush1.msra.mxu0 0.0
      %220 = vmatprep.subr.mxu0 0.0
      %221 = vmatpush1.msra.mxu0 0.0
      %222 = vmatprep.subr.mxu0 0.0
      %223 = vmatpush1.msra.mxu0 0.0
      %224 = vmatprep.subr.mxu0 0.0
      %225 = vmatpush1.msra.mxu0 0.0
      %226 = vmatprep.subr.mxu0 0.0
      %227 = vmatpush1.msra.mxu0 0.0
      %228 = vmatprep.subr.mxu0 0.0
      %229 = vmatpush1.msra.mxu0 0.0
      %230 = vmatprep.subr.mxu0 0.0
      %231 = vmatpush1.msra.mxu0 0.0
      %232 = vmatprep.subr.mxu0 0.0
      %233 = vmatpush1.msra.mxu0 0.0
      %234 = vmatprep.subr.mxu0 0.0
      %235 = vmatpush1.msra.mxu0 0.0
      %236 = vmatprep.subr.mxu0 0.0
      %237 = vmatpush1.msra.mxu0 0.0
      %238 = vmatprep.subr.mxu0 0.0
      %239 = vmatpush1.msra.mxu0 0.0
      %240 = vmatprep.subr.mxu0 0.0
      %241 = vmatpush1.msra.mxu0 0.0
      %242 = vmatprep.subr.mxu0 0.0
      %243 = vmatpush1.msra.mxu0 0.0
      %244 = vmatprep.subr.mxu0 0.0
      %245 = vmatpush1.msra.mxu0 0.0
      %246 = vmatprep.subr.mxu0 0.0
      %247 = vmatpush1.msra.mxu0 0.0
      %248 = vmatprep.subr.mxu0 0.0
      %249 = vmatpush1.msra.mxu0 0.0
      %250 = vmatprep.subr.mxu0 0.0
      %251 = vmatpush1.msra.mxu0 0.0
      %252 = vmatprep.subr.mxu0 0.0
      %253 = vmatpush1.msra.mxu0 0.0
      %254 = vmatprep.subr.mxu0 0.0
      %255 = vmatpush1.msra.mxu0 0.0
      %256 = vmatprep.subr.mxu0 0.0
      %257 = vmatpush1.msra.mxu0 0.0
      %258 = vmatprep.subr.mxu0 0.0
      %259 = vmatpush1.msra.mxu0 0.0
      %260 = vmatprep.subr.mxu0 0.0
      %261 = vmatpush1.msra.mxu0 0.0
      %262 = vmatprep.subr.mxu0 0.0
      %263 = vmatpush1.msra.mxu0 0.0
      %264 = vmatprep.mubr.f32.mxu0 0.0
      %265 = vmatmul.mubr.f32.gmra.mrb[0].mxu0 %v195
      %v266 = vpop.f32.mrb[0].mxu0
      %v267 = vadd.f32 %v192, %v266
      %v268 = vpop.f32.mrb[0].mxu0
      %269 = vdwg.mxu0
      %270 = vst [vmem:[#allocation8] sm:$0xff] %v267
    $region29: #{tpu_custom_call.1} parent=1 // pred_fallthru
      _
    // Predicated region
    $region30: #{tpu_custom_call.1} parent=1 // pred_check
      _
    $region31: #{tpu_custom_call.1} parent=1 // pred_check_branch
      %272 = sbr.rel (0) target = $region33
    $region32: #{tpu_custom_call.1} parent=1 // pred_region
      %s274 = ssub.s32 128, 128
      %275 = vsyncadd [#allocation5], %s274
      %s277 = sshll.u32 [#allocation8], 4
      %s278 = int_to_ptr.vmem [resolvable:$true] %s277
      %280 = dma.vmem_to_hbm [thread:$0]  %s278, 128, %s3, [#allocation5]
    $region33: #{tpu_custom_call.1} parent=1 // pred_fallthru
      _
    // Predicated region
    $region34: #{tpu_custom_call.1} parent=1 // pred_check
      _
    $region35: #{tpu_custom_call.1} parent=1 // pred_check_branch
      %282 = sbr.rel (0) target = $region37
    $region36: #{tpu_custom_call.1} parent=1 // pred_region
      %283 = dma.done [#allocation5], 128
    $region37: #{tpu_custom_call.1} parent=1 // pred_fallthru
      _
    %284 = vsyncpa [#allocation4], 1
    %285 = vsyncpa [#allocation7], 1
    %286 = vsyncpa [#allocation5], 1

</llo_original>
